<compile_context>
chip_gen: v7x
topology: tpu7x:2x2x1
jax: 0.10.0
libtpu: 0.0.40
codegen_flags: <defaults>
</compile_context>

<pallas_src>
import functools

import jax
import jax.numpy as jnp
from jax.experimental import pallas as pl
from jax.experimental.pallas import tpu as pltpu


_VMEM_LIMIT_BYTES = 48 * 1024 * 1024  # explicit scoped-VMEM budget (headroom on v5e/v6e/v7x)


def _compiler_params(dimension_semantics):
    return pltpu.CompilerParams(
        dimension_semantics=dimension_semantics,
        vmem_limit_bytes=_VMEM_LIMIT_BYTES,
    )


def _pick_tile(dim, target, align):
    """Largest `align`-multiple tile <= target that evenly divides dim (else full dim)."""
    if dim <= target:
        return dim
    t = (target // align) * align
    while t >= align:
        if dim % t == 0:
            return t
        t -= align
    return dim  # fallback: single full-size block (always layout-legal)


# ---------------- tiled linear (projection) kernels ----------------

def _matmul_kernel(x_ref, wt_ref, o_ref, acc_ref):
    @pl.when(pl.program_id(2) == 0)
    def _init():
        acc_ref[...] = jnp.zeros_like(acc_ref)

    acc_ref[...] += jnp.dot(x_ref[...], wt_ref[...],
                            preferred_element_type=jnp.float32)

    @pl.when(pl.program_id(2) == pl.num_programs(2) - 1)
    def _done():
        o_ref[...] = acc_ref[...].astype(o_ref.dtype)


def _matmul_bias_kernel(x_ref, wt_ref, b_ref, o_ref, acc_ref):
    @pl.when(pl.program_id(2) == 0)
    def _init():
        acc_ref[...] = jnp.zeros_like(acc_ref)

    acc_ref[...] += jnp.dot(x_ref[...], wt_ref[...],
                            preferred_element_type=jnp.float32)

    @pl.when(pl.program_id(2) == pl.num_programs(2) - 1)
    def _done():
        o_ref[...] = (acc_ref[...] + b_ref[...].astype(jnp.float32)).astype(o_ref.dtype)


def pallas_linear(x2d, wt, bias=None, *, tm=256, tn=256, tk=512):
    """y = x2d @ wt (+ bias).  x2d: [M, K], wt: [K, N] (weight already transposed)."""
    M, K = x2d.shape
    N = wt.shape[1]
    tm = _pick_tile(M, tm, 8)
    tn = _pick_tile(N, tn, 128)
    tk = _pick_tile(K, tk, 128)
    grid = (M // tm, N // tn, K // tk)

    in_specs = [
        pl.BlockSpec((tm, tk), lambda i, j, k: (i, k)),
        pl.BlockSpec((tk, tn), lambda i, j, k: (k, j)),
    ]
    args = [x2d, wt]
    kernel = _matmul_kernel
    if bias is not None:
        in_specs.append(pl.BlockSpec((1, tn), lambda i, j, k: (0, j)))
        args.append(bias.reshape(1, N))
        kernel = _matmul_bias_kernel

    return pl.pallas_call(
        kernel,
        out_shape=jax.ShapeDtypeStruct((M, N), x2d.dtype),
        grid=grid,
        in_specs=in_specs,
        out_specs=pl.BlockSpec((tm, tn), lambda i, j, k: (i, j)),
        scratch_shapes=[pltpu.VMEM((tm, tn), jnp.float32)],
        compiler_params=_compiler_params(("parallel", "parallel", "arbitrary")),
    )(*args)


# ---------------- attention kernel (one batch column, all heads) ----------------

def _attn_kernel(*refs, num_heads, scale, fused_qkv, has_mask):
    i = 0
    if fused_qkv:
        qkv = refs[i][...]
        i += 1
        E = qkv.shape[-1] // 3
        q, k, v = qkv[:, :E], qkv[:, E:2 * E], qkv[:, 2 * E:]
    else:
        q = refs[i][...]
        k = refs[i + 1][...]
        v = refs[i + 2][...]
        i += 3
    mask = None
    if has_mask:
        mask = refs[i][...]
        i += 1
    o_ref = refs[i]
    w_ref = refs[i + 1]

    T, E = q.shape
    D = E // num_heads

    # Scale q in its native dtype (matches the reference `q = q * dk ** -0.5`).
    q = q * jnp.asarray(scale, q.dtype)

    outs = []
    for h in range(num_heads):
        qh = q[:, h * D:(h + 1) * D]
        kh = k[:, h * D:(h + 1) * D]
        vh = v[:, h * D:(h + 1) * D]
        # Scores on the MXU: native-dtype operands, f32 accumulation.
        s = jax.lax.dot_general(qh, kh, (((1,), (1,)), ((), ())),
                                preferred_element_type=jnp.float32)
        if mask is not None:
            s = s + (mask if mask.ndim == 2 else mask[h])
        s = s - jnp.max(s, axis=-1, keepdims=True)
        p = jnp.exp(s)
        p = p * pl.reciprocal(jnp.sum(p, axis=-1, keepdims=True), approx=True)
        w_ref[h] = p.astype(w_ref.dtype)
        outs.append(jnp.dot(p.astype(vh.dtype), vh,
                            preferred_element_type=jnp.float32))
    # Lane-dense (T, E) store, written straight into the [T, B, E] output layout.
    o_ref[...] = jnp.concatenate(outs, axis=-1).astype(o_ref.dtype)


def pallas_attention(q, k, v, mask, num_heads, scale):
    """q: [T,B,E]  (or fused qkv [L,B,3E] with k = v = None);  k,v: [S,B,E].
    mask: None | [T,S] | [B*H,T,S] (additive).  Returns ([T,B,E], [B*H,T,S])."""
    fused = k is None
    if fused:
        T, B, E3 = q.shape
        E = E3 // 3
        S = T
    else:
        T, B, E = q.shape
        S = k.shape[0]
    H = num_heads

    in_specs = []
    args = []
    if fused:
        in_specs.append(pl.BlockSpec((T, None, 3 * E), lambda b: (0, b, 0)))
        args.append(q)
    else:
        in_specs.append(pl.BlockSpec((T, None, E), lambda b: (0, b, 0)))
        in_specs.append(pl.BlockSpec((S, None, E), lambda b: (0, b, 0)))
        in_specs.append(pl.BlockSpec((S, None, E), lambda b: (0, b, 0)))
        args.extend([q, k, v])

    has_mask = mask is not None
    if has_mask:
        if mask.ndim == 2:
            # Broadcast via index_map; never materialized to [B*H, T, S].
            args.append(mask.astype(jnp.float32).reshape(1, T, S))
            in_specs.append(pl.BlockSpec((None, T, S), lambda b: (0, 0, 0)))
        else:
            args.append(mask.astype(jnp.float32))
            in_specs.append(pl.BlockSpec((H, T, S), lambda b: (b, 0, 0)))

    kernel = functools.partial(_attn_kernel, num_heads=H, scale=scale,
                               fused_qkv=fused, has_mask=has_mask)
    # TODO(synk): for very long src_len, add an S grid axis with online-softmax
    # (flash-style) so the (H, T, S) weight block does not have to fit VMEM.
    out, w = pl.pallas_call(
        kernel,
        out_shape=(
            jax.ShapeDtypeStruct((T, B, E), q.dtype),
            jax.ShapeDtypeStruct((B * H, T, S), q.dtype),
        ),
        grid=(B,),
        in_specs=in_specs,
        out_specs=(
            pl.BlockSpec((T, None, E), lambda b: (0, b, 0)),
            pl.BlockSpec((H, T, S), lambda b: (b, 0, 0)),
        ),
        compiler_params=_compiler_params(("parallel",)),
    )(*args)
    return out, w


# ---------------- module-equivalent forward ----------------

def my_multihead_attention(query, key, value, params, num_heads, attn_mask=None,
                           key_padding_mask=None):
    T, B, E = query.shape
    S = key.shape[0]
    D = E // num_heads
    assert D * num_heads == E
    scale = float(D) ** (-0.5)

    if attn_mask is not None:
        if attn_mask.ndim == 2:
            if attn_mask.shape != (T, S):
                raise RuntimeError("attention mask维度错误1")
        elif attn_mask.ndim == 3:
            if attn_mask.shape != (B * num_heads, T, S):
                raise RuntimeError("attention mask维度错误2")

    # NOTE: in the reference, key_padding_mask uses a non-in-place masked_fill whose
    # result is discarded, so it has no effect on the output -> faithfully omitted.
    # Dropout p=0.0 -> identity.
    # TODO(synk): stateful dropout for p > 0 not implemented (reference default p=0.0).

    wq = params["q_proj_weight"]
    wk = params["k_proj_weight"]
    wv = params["v_proj_weight"]

    if (query is key) and (key is value):
        # Self-attention: fused QKV projection -> activations read from HBM once.
        # (In a real model the fused/transposed weight would be precomputed once.)
        wt_qkv = jnp.concatenate([wq, wk, wv], axis=0).T          # [E, 3E]
        qkv = pallas_linear(query.reshape(T * B, E), wt_qkv).reshape(T, B, 3 * E)
        out_h, attn_w = pallas_attention(qkv, None, None, attn_mask, num_heads, scale)
    else:
        q = pallas_linear(query.reshape(T * B, E), wq.T).reshape(T, B, E)
        k = pallas_linear(key.reshape(S * B, E), wk.T).reshape(S, B, E)
        v = pallas_linear(value.reshape(S * B, E), wv.T).reshape(S, B, E)
        out_h, attn_w = pallas_attention(q, k, v, attn_mask, num_heads, scale)

    # Output projection: attention output is already in [T, B, E] layout (no transpose).
    attn_out = pallas_linear(
        out_h.reshape(T * B, E), params["out_proj_weight"].T, params["out_proj_bias"]
    ).reshape(T, B, E)

    # Reproduce the reference's flat view(num_heads, batch, T, S).sum(0)/num_heads quirk:
    # attn_w rows are ordered b*num_heads + h, exactly like the PyTorch [B*H, T, S] tensor.
    attn_w_avg = attn_w.reshape(num_heads, B, T, S).sum(axis=0) / num_heads
    return attn_out, attn_w_avg


# ---------------- pure-JAX reference (for in-script validation) ----------------

def _reference_mha(query, key, value, params, num_heads, attn_mask=None):
    T, B, E = query.shape
    S = key.shape[0]
    D = E // num_heads
    q = query @ params["q_proj_weight"].T
    k = key @ params["k_proj_weight"].T
    v = value @ params["v_proj_weight"].T
    q = q * float(D) ** (-0.5)
    q = q.reshape(T, B * num_heads, D).transpose(1, 0, 2)
    k = k.reshape(S, B * num_heads, D).transpose(1, 0, 2)
    v = v.reshape(S, B * num_heads, D).transpose(1, 0, 2)
    w = jnp.einsum("btd,bsd->bts", q, k)
    if attn_mask is not None:
        w = w + (attn_mask[None] if attn_mask.ndim == 2 else attn_mask)
    w = jax.nn.softmax(w, axis=-1)
    out = jnp.einsum("bts,bsd->btd", w, v)
    out = out.transpose(1, 0, 2).reshape(T, B, E)
    out = out @ params["out_proj_weight"].T + params["out_proj_bias"]
    w_avg = w.reshape(num_heads, B, T, S).sum(axis=0) / num_heads
    return out, w_avg


# ---------------- parameter init ----------------

def init_params(prng, embed_dim):
    k1, k2, k3, k4, k5 = jax.random.split(prng, 5)
    s = 1.0 / (embed_dim ** 0.5)
    return {
        "q_proj_weight": s * jax.random.normal(k1, (embed_dim, embed_dim), jnp.float32),
        "k_proj_weight": s * jax.random.normal(k2, (embed_dim, embed_dim), jnp.float32),
        "v_proj_weight": s * jax.random.normal(k3, (embed_dim, embed_dim), jnp.float32),
        "out_proj_weight": s * jax.random.normal(k4, (embed_dim, embed_dim), jnp.float32),
        "out_proj_bias": s * jax.random.normal(k5, (embed_dim,), jnp.float32),
    }


if __name__ == "__main__":
    tgt_len, src_len, batch, embed_dim, num_heads = 8, 8, 2, 32, 4

    root = jax.random.PRNGKey(0)
    kx, kk, kv, km, kp = jax.random.split(root, 5)
    params = init_params(kp, embed_dim)

    # Case 1: self-attention (fused QKV projection path) with a 2-D additive mask.
    x = jax.random.normal(kx, (tgt_len, batch, embed_dim), jnp.float32)
    attn_mask = jax.random.normal(km, (tgt_len, tgt_len), jnp.float32)
    out1, w1 = my_multihead_attention(x, x, x, params, num_heads, attn_mask=attn_mask)
    jax.block_until_ready((out1, w1))
    assert out1.shape == (tgt_len, batch, embed_dim)
    assert w1.shape == (batch, tgt_len, tgt_len)
    ref_out1, ref_w1 = _reference_mha(x, x, x, params, num_heads, attn_mask=attn_mask)
    assert jnp.allclose(out1, ref_out1, rtol=2e-2, atol=5e-3), "self-attn output mismatch"
    assert jnp.allclose(w1, ref_w1, rtol=2e-2, atol=5e-3), "self-attn weights mismatch"

    # Case 2: cross-attention (separate projections), no mask (mask DMA skipped).
    query = jax.random.normal(kx, (tgt_len, batch, embed_dim), jnp.float32)
    key = jax.random.normal(kk, (src_len, batch, embed_dim), jnp.float32)
    value = jax.random.normal(kv, (src_len, batch, embed_dim), jnp.float32)
    out2, w2 = my_multihead_attention(query, key, value, params, num_heads)
    jax.block_until_ready((out2, w2))
    assert out2.shape == (tgt_len, batch, embed_dim)
    assert w2.shape == (batch, tgt_len, src_len)
    ref_out2, ref_w2 = _reference_mha(query, key, value, params, num_heads)
    assert jnp.allclose(out2, ref_out2, rtol=2e-2, atol=5e-3), "cross-attn output mismatch"
    assert jnp.allclose(w2, ref_w2, rtol=2e-2, atol=5e-3), "cross-attn weights mismatch"

    print("KERNEL_OK")
</pallas_src>

<mosaic_0001>
module attributes {stable_mosaic.version = 11 : i64} {
  func.func @_matmul_kernel(%arg0: i32, %arg1: i32, %arg2: i32, %arg3: memref<16x32xf32, #tpu.memory_space<vmem>>, %arg4: memref<32x96xf32, #tpu.memory_space<vmem>>, %arg5: memref<16x96xf32, #tpu.memory_space<vmem>>, %arg6: memref<16x96xf32, #tpu.memory_space<vmem>>) attributes {dimension_semantics = [#tpu.dimension_semantics<parallel>, #tpu.dimension_semantics<parallel>, #tpu.dimension_semantics<arbitrary>], iteration_bounds = array<i64: 1, 1, 1>, scalar_prefetch = 0 : i64, scratch_operands = 1 : i64, tpu.core_type = #tpu.core_type<tc>, window_params = [{transform_indices = @transform_0, window_bounds = array<i64: 16, 32>}, {transform_indices = @transform_1, window_bounds = array<i64: 32, 96>}, {transform_indices = @transform_2, window_bounds = array<i64: 16, 96>}]} {
    %c0_i32 = arith.constant 0 : i32
    %0 = arith.cmpi eq, %arg2, %c0_i32 : i32
    %1 = arith.extui %0 : i1 to i32
    %c0_i32_0 = arith.constant 0 : i32
    %2 = arith.cmpi ne, %1, %c0_i32_0 : i32
    scf.if %2 {
      %cst_10 = arith.constant 0.000000e+00 : f32
      %12 = vector.broadcast %cst_10 : f32 to vector<16x96xf32>
      %c0_11 = arith.constant 0 : index
      %c0_12 = arith.constant 0 : index
      %13 = vector.load %arg6[%c0_11, %c0_12] : memref<16x96xf32, #tpu.memory_space<vmem>>, vector<16x96xf32>
      tpu.vector_store %arg6[%c0_11, %c0_12], %12 {strides = array<i32>} : memref<16x96xf32, #tpu.memory_space<vmem>>, vector<16x96xf32>,
    } else {
    }
    %c0 = arith.constant 0 : index
    %c0_1 = arith.constant 0 : index
    %3 = vector.load %arg6[%c0, %c0_1] : memref<16x96xf32, #tpu.memory_space<vmem>>, vector<16x96xf32>
    %c0_2 = arith.constant 0 : index
    %c0_3 = arith.constant 0 : index
    %4 = vector.load %arg3[%c0_2, %c0_3] : memref<16x32xf32, #tpu.memory_space<vmem>>, vector<16x32xf32>
    %c0_4 = arith.constant 0 : index
    %c0_5 = arith.constant 0 : index
    %5 = vector.load %arg4[%c0_4, %c0_5] : memref<32x96xf32, #tpu.memory_space<vmem>>, vector<32x96xf32>
    %cst = arith.constant dense<0.000000e+00> : vector<16x96xf32>
    %6 = tpu.matmul %4, %5, %cst {dimension_numbers = #tpu.dot_dimension_numbers<[1], [0], [0], [1], [0, 0, 1, 1], [], []>} : vector<16x32xf32>, vector<32x96xf32>, vector<16x96xf32> -> vector<16x96xf32>
    %7 = arith.addf %3, %6 : vector<16x96xf32>
    %c0_6 = arith.constant 0 : index
    %c0_7 = arith.constant 0 : index
    %8 = vector.load %arg6[%c0_6, %c0_7] : memref<16x96xf32, #tpu.memory_space<vmem>>, vector<16x96xf32>
    tpu.vector_store %arg6[%c0_6, %c0_7], %7 {strides = array<i32>} : memref<16x96xf32, #tpu.memory_space<vmem>>, vector<16x96xf32>,
    %c0_i32_8 = arith.constant 0 : i32
    %9 = arith.cmpi eq, %arg2, %c0_i32_8 : i32
    %10 = arith.extui %9 : i1 to i32
    %c0_i32_9 = arith.constant 0 : i32
    %11 = arith.cmpi ne, %10, %c0_i32_9 : i32
    scf.if %11 {
      %c0_10 = arith.constant 0 : index
      %c0_11 = arith.constant 0 : index
      %12 = vector.load %arg6[%c0_10, %c0_11] : memref<16x96xf32, #tpu.memory_space<vmem>>, vector<16x96xf32>
      %c0_12 = arith.constant 0 : index
      %c0_13 = arith.constant 0 : index
      %13 = vector.load %arg5[%c0_12, %c0_13] : memref<16x96xf32, #tpu.memory_space<vmem>>, vector<16x96xf32>
      tpu.vector_store %arg5[%c0_12, %c0_13], %12 {strides = array<i32>} : memref<16x96xf32, #tpu.memory_space<vmem>>, vector<16x96xf32>,
    } else {
    }
    return
  }
  func.func @transform_0(%arg0: i32, %arg1: i32, %arg2: i32) -> (i32, i32) {
    %c0_i32 = arith.constant 0 : i32
    return %arg0, %arg2 : i32, i32
  }
  func.func @transform_1(%arg0: i32, %arg1: i32, %arg2: i32) -> (i32, i32) {
    %c0_i32 = arith.constant 0 : i32
    return %arg2, %arg1 : i32, i32
  }
  func.func @transform_2(%arg0: i32, %arg1: i32, %arg2: i32) -> (i32, i32) {
    %c0_i32 = arith.constant 0 : i32
    return %arg0, %arg1 : i32, i32
  }
}

</mosaic_0001>

<llo_original>
// kernel: tpu_custom_call.1
$region0: #{tpu_custom_call.1}
  #allocation0 [shape = 'u32[]', space=smem, size = 0x4, offset = 0x4, fixed_abs, tag = 'smem constant byte address 0x4 - core index']
  #allocation1 [shape = 'u32[144,128]{1,0:T(1,128)}', space=vmem, size = 0x12000, scoped, tag = 'internal scratch']
  #allocation2 [shape = 'f32[16,96]{1,0:T(8,128)}', space=vmem, size = 0x2000, scoped, tag = 'scratch operand']
  %s0 = inlined_call_operand.hbm [shape: f32[16,32], index: 0, kind: input, shape index: {}]
  %s1 = inlined_call_operand.hbm [shape: f32[32,96], index: 1, kind: input, shape index: {}]
  %s2 = inlined_call_operand.hbm [shape: f32[16,96], index: 2, kind: output, shape index: {}]
  %s3 = sld [smem:[#allocation0]]
  $region34: #{tpu_custom_call.1} parent=0
    _
  %s5 = ssub.s32 1, %s3
  %s6 = scalar_select 0, %s5, %s3
  $region1: #{tpu_custom_call.1} parent=0
    #allocation3 [shape = 'u8[8192]{0}', space=vmem, size = 0x2000, scoped, tag = 'input window, operand 0, single buffered']
    #allocation4 [shape = 's32[1]{0}', space=sflag, size = 0x4, scoped, tag = 'scoped memory for tpu_custom_call.1']
    #allocation5 [shape = 's32[1]{0}', space=sflag, size = 0x4, scoped, tag = 'scoped memory for tpu_custom_call.1']
    #allocation6 [shape = 'u8[16384]{0}', space=vmem, size = 0x4000, scoped, tag = 'input window, operand 1, single buffered']
    #allocation7 [shape = 's32[1]{0}', space=sflag, size = 0x4, scoped, tag = 'scoped memory for tpu_custom_call.1']
    #allocation8 [shape = 'u8[8192]{0}', space=vmem, size = 0x2000, scoped, tag = 'output window, operand 0, single buffered']
    %7 = vsyncpa [#allocation4], 0
    %8 = vsyncpa [#allocation7], 0
    %9 = vsyncpa [#allocation5], 0
    // Predicated region
    $region2: #{tpu_custom_call.1} parent=1 // pred_check
      _
    $region3: #{tpu_custom_call.1} parent=1 // pred_check_branch
      %11 = sbr.rel (0) target = $region5
    $region4: #{tpu_custom_call.1} parent=1 // pred_region
      %s13 = ssub.s32 256, 256
      %14 = vsyncadd [#allocation4], %s13
      %s15 = sshll.u32 [#allocation3], 4
      %s16 = int_to_ptr.vmem [resolvable:$true] %s15
      %21 = dma.hbm_to_vmem [thread:$0]  %s0, 256, %s16, [#allocation4], 128, 128, 8
    $region5: #{tpu_custom_call.1} parent=1 // pred_fallthru
      _
    // Predicated region
    $region6: #{tpu_custom_call.1} parent=1 // pred_check
      _
    $region7: #{tpu_custom_call.1} parent=1 // pred_check_branch
      %23 = sbr.rel (0) target = $region9
    $region8: #{tpu_custom_call.1} parent=1 // pred_region
      %s25 = ssub.s32 512, 512
      %26 = vsyncadd [#allocation7], %s25
      %s27 = sshll.u32 [#allocation6], 4
      %s28 = int_to_ptr.vmem [resolvable:$true] %s27
      %33 = dma.hbm_to_vmem [thread:$0]  %s1, 512, %s28, [#allocation7], 128, 128, 8
    $region9: #{tpu_custom_call.1} parent=1 // pred_fallthru
      _
    // Predicated region
    $region10: #{tpu_custom_call.1} parent=1 // pred_check
      _
    $region11: #{tpu_custom_call.1} parent=1 // pred_check_branch
      %35 = sbr.rel (0) target = $region13
    $region12: #{tpu_custom_call.1} parent=1 // pred_region
      %36 = dma.done [#allocation4], 256
    $region13: #{tpu_custom_call.1} parent=1 // pred_fallthru
      _
    // Predicated region
    $region14: #{tpu_custom_call.1} parent=1 // pred_check
      _
    $region15: #{tpu_custom_call.1} parent=1 // pred_check_branch
      %38 = sbr.rel (0) target = $region17
    $region16: #{tpu_custom_call.1} parent=1 // pred_region
      %39 = dma.done [#allocation7], 512
    $region17: #{tpu_custom_call.1} parent=1 // pred_fallthru
      _
    %p40 = scmp.eq.s32.totalorder 0, 0
    // Predicated region
    $region18: #{tpu_custom_call.1} parent=1 // pred_check
      %p41 = pneg %p40
    $region19: #{tpu_custom_call.1} parent=1 // pred_check_branch
      %43 = sbr.rel (%p41) target = $region21
    $region20: #{tpu_custom_call.1} parent=1 // pred_region
      %vm44 = vcmask 785408
      %45 = vst.msk [vmem:[#allocation2] sm:$0xff] %vm44, 0.0
      %46 = vst.msk [vmem:[#allocation2 + $0x8] sm:$0xff] %vm44, 0.0
    $region21: #{tpu_custom_call.1} parent=1 // pred_fallthru
      _
    %v47 = vld [vmem:[#allocation2] sm:$0xff]
    %v48 = vld [vmem:[#allocation2 + $0x8] sm:$0xff]
    %v49 = vld [vmem:[#allocation3] sm:$0xff]
    %v50 = vld [vmem:[#allocation3 + $0x8] sm:$0xff]
    %v51 = vld [vmem:[#allocation6] sm:$0xff]
    %v52 = vld [vmem:[#allocation6 + $0x8] sm:$0xff]
    %v53 = vld [vmem:[#allocation6 + $0x10] sm:$0xff]
    %v54 = vld [vmem:[#allocation6 + $0x18] sm:$0xff]
    %vm55 = vcmask 261120
    %v57 = vsel %vm55, %v49, 0
    %v60 = vsel %vm55, %v50, 0
    %62 = vmatprep.subr.mxu0 0.0
    %63 = vmatpush1.msra.mxu0 %v51
    %64 = vmatprep.subr.mxu0 0.0
    %65 = vmatpush1.msra.mxu0 %v52
    %66 = vmatprep.subr.mxu0 0.0
    %67 = vmatpush1.msra.mxu0 %v53
    %68 = vmatprep.subr.mxu0 0.0
    %69 = vmatpush1.msra.mxu0 %v54
    %70 = vmatprep.subr.mxu0 0.0
    %71 = vmatpush1.msra.mxu0 0.0
    %72 = vmatprep.subr.mxu0 0.0
    %73 = vmatpush1.msra.mxu0 0.0
    %74 = vmatprep.subr.mxu0 0.0
    %75 = vmatpush1.msra.mxu0 0.0
    %76 = vmatprep.subr.mxu0 0.0
    %77 = vmatpush1.msra.mxu0 0.0
    %78 = vmatprep.subr.mxu0 0.0
    %79 = vmatpush1.msra.mxu0 0.0
    %80 = vmatprep.subr.mxu0 0.0
    %81 = vmatpush1.msra.mxu0 0.0
    %82 = vmatprep.subr.mxu0 0.0
    %83 = vmatpush1.msra.mxu0 0.0
    %84 = vmatprep.subr.mxu0 0.0
    %85 = vmatpush1.msra.mxu0 0.0
    %86 = vmatprep.subr.mxu0 0.0
    %87 = vmatpush1.msra.mxu0 0.0
    %88 = vmatprep.subr.mxu0 0.0
    %89 = vmatpush1.msra.mxu0 0.0
    %90 = vmatprep.subr.mxu0 0.0
    %91 = vmatpush1.msra.mxu0 0.0
    %92 = vmatprep.subr.mxu0 0.0
    %93 = vmatpush1.msra.mxu0 0.0
    %94 = vmatprep.subr.mxu0 0.0
    %95 = vmatpush1.msra.mxu0 0.0
    %96 = vmatprep.subr.mxu0 0.0
    %97 = vmatpush1.msra.mxu0 0.0
    %98 = vmatprep.subr.mxu0 0.0
    %99 = vmatpush1.msra.mxu0 0.0
    %100 = vmatprep.subr.mxu0 0.0
    %101 = vmatpush1.msra.mxu0 0.0
    %102 = vmatprep.subr.mxu0 0.0
    %103 = vmatpush1.msra.mxu0 0.0
    %104 = vmatprep.subr.mxu0 0.0
    %105 = vmatpush1.msra.mxu0 0.0
    %106 = vmatprep.subr.mxu0 0.0
    %107 = vmatpush1.msra.mxu0 0.0
    %108 = vmatprep.subr.mxu0 0.0
    %109 = vmatpush1.msra.mxu0 0.0
    %110 = vmatprep.subr.mxu0 0.0
    %111 = vmatpush1.msra.mxu0 0.0
    %112 = vmatprep.subr.mxu0 0.0
    %113 = vmatpush1.msra.mxu0 0.0
    %114 = vmatprep.subr.mxu0 0.0
    %115 = vmatpush1.msra.mxu0 0.0
    %116 = vmatprep.subr.mxu0 0.0
    %117 = vmatpush1.msra.mxu0 0.0
    %118 = vmatprep.subr.mxu0 0.0
    %119 = vmatpush1.msra.mxu0 0.0
    %120 = vmatprep.subr.mxu0 0.0
    %121 = vmatpush1.msra.mxu0 0.0
    %122 = vmatprep.subr.mxu0 0.0
    %123 = vmatpush1.msra.mxu0 0.0
    %124 = vmatprep.subr.mxu0 0.0
    %125 = vmatpush1.msra.mxu0 0.0
    %126 = vmatprep.mubr.f32.mxu0 0.0
    %127 = vmatmul.mubr.f32.gmra.mrb[0].mxu0 %v57
    %v128 = vpop.f32.mrb[0].mxu0
    %v129 = vadd.f32 0.0, %v128
    %v130 = vpop.f32.mrb[0].mxu0
    %131 = vmatprep.mubr.f32.mxu0 0.0
    %132 = vmatmul.mubr.f32.gmra.mrb[0].mxu0 %v60
    %v133 = vpop.f32.mrb[0].mxu0
    %v134 = vadd.f32 0.0, %v133
    %v135 = vpop.f32.mrb[0].mxu0
    %136 = vdwg.mxu0
    %v137 = vadd.f32 %v47, %v129
    %v138 = vadd.f32 %v48, %v134
    %vm139 = vcmask 785408
    %140 = vst.msk [vmem:[#allocation2] sm:$0xff] %vm139, %v137
    %141 = vst.msk [vmem:[#allocation2 + $0x8] sm:$0xff] %vm139, %v138
    // Predicated region
    $region22: #{tpu_custom_call.1} parent=1 // pred_check
      %p142 = pneg %p40
    $region23: #{tpu_custom_call.1} parent=1 // pred_check_branch
      %144 = sbr.rel (%p142) target = $region25
    $region24: #{tpu_custom_call.1} parent=1 // pred_region
      %v145 = vld [vmem:[#allocation2] sm:$0xff]
      %v146 = vld [vmem:[#allocation2 + $0x8] sm:$0xff]
      %147 = vst.msk [vmem:[#allocation8] sm:$0xff] %vm139, %v145
      %148 = vst.msk [vmem:[#allocation8 + $0x8] sm:$0xff] %vm139, %v146
    $region25: #{tpu_custom_call.1} parent=1 // pred_fallthru
      _
    // Predicated region
    $region26: #{tpu_custom_call.1} parent=1 // pred_check
      _
    $region27: #{tpu_custom_call.1} parent=1 // pred_check_branch
      %150 = sbr.rel (0) target = $region29
    $region28: #{tpu_custom_call.1} parent=1 // pred_region
      %s152 = ssub.s32 256, 256
      %153 = vsyncadd [#allocation5], %s152
      %s154 = sshll.u32 [#allocation8], 4
      %s155 = int_to_ptr.vmem [resolvable:$true] %s154
      %160 = dma.vmem_to_hbm [thread:$0]  %s155, 256, %s2, [#allocation5], 128, 128, 8
    $region29: #{tpu_custom_call.1} parent=1 // pred_fallthru
      _
    // Predicated region
    $region30: #{tpu_custom_call.1} parent=1 // pred_check
      _
    $region31: #{tpu_custom_call.1} parent=1 // pred_check_branch
      %162 = sbr.rel (0) target = $region33
    $region32: #{tpu_custom_call.1} parent=1 // pred_region
      %163 = dma.done [#allocation5], 256
    $region33: #{tpu_custom_call.1} parent=1 // pred_fallthru
      _
    %164 = vsyncpa [#allocation4], 1
    %165 = vsyncpa [#allocation7], 1
    %166 = vsyncpa [#allocation5], 1

</llo_original>
